<compile_context>
chip_gen: v5e
topology: v5e:2x2
jax: 0.10.0
libtpu: 0.0.40
codegen_flags: <defaults>
</compile_context>

<pallas_src>
import functools
from typing import NamedTuple

import jax
import jax.numpy as jnp
from jax.experimental import pallas as pl
from jax.experimental.pallas import tpu as pltpu


def _round_up(x, m):
    return (x + m - 1) // m * m


def _vmem_capacity_bytes():
    try:
        cap = getattr(pltpu.get_tpu_info(), "vmem_capacity_bytes", None)
        if cap:
            return int(cap)
    except Exception:
        pass
    return 64 << 20  # conservative fallback (v7x-sized)


def _num_tensorcores():
    try:
        info = pltpu.get_tpu_info()
        for name in ("num_cores", "num_tensorcores", "tensorcore_count", "cores_per_chip"):
            v = getattr(info, name, None)
            if isinstance(v, int) and v > 0:
                return v
    except Exception:
        pass
    return 1


# --------------------------------------------------------------------------- #
# Planning / packing
# --------------------------------------------------------------------------- #
class CrosscoderPlan(NamedTuple):
    B: int
    L: int
    D: int
    A: int
    tb: int
    ta: int
    B_pad: int
    A_pad: int
    LD_pad: int
    n_split: int
    compute_dtype: object
    out_dtype: object
    vmem_limit: int


def make_plan(B, L, D, A, *, compute_dtype=jnp.bfloat16, out_dtype=jnp.float32,
              tb=256, ta=512):
    """Choose padded shapes / tile sizes for the current TPU generation."""
    LD = L * D
    compute_dtype = jnp.dtype(compute_dtype)
    out_dtype = jnp.dtype(out_dtype)
    cbytes = compute_dtype.itemsize
    obytes = out_dtype.itemsize
    # Dense sublane packing: 8 rows for f32, 16 for bf16, 32 for int8/fp8.
    sub = 8 * max(1, 4 // cbytes)

    vmem_cap = _vmem_capacity_bytes()
    # Generation-aware scoped-VMEM ceiling (~100 MiB on 128 MiB parts, ~51 MiB on 64 MiB).
    vmem_limit = max(32 << 20, min(int(vmem_cap * 0.80), 100 << 20))
    budget = vmem_limit - (4 << 20)

    def lane_pad(n):
        # Prefer 256-lane multiples (2x256^2 MXU on v6e/v7x) unless that wastes >12.5%.
        p256, p128 = _round_up(n, 256), _round_up(n, 128)
        return p256 if (p256 == p128 or (p256 - n) * 8 <= n) else p128

    LD_pad = lane_pad(LD)
    ta = _round_up(min(ta, _round_up(A, 128)), 128)
    tb = _round_up(min(max(tb, sub), _round_up(B, sub)), sub)
    B_pad = _round_up(B, tb)

    # Ensure >=2 batch tiles so the "parallel" axis can shard across TensorCores.
    if _num_tensorcores() >= 2:
        while B_pad // tb < 2 and tb > sub:
            tb = _round_up(max(sub, tb // 2), sub)
            B_pad = _round_up(B, tb)

    use_acc = out_dtype != jnp.dtype(jnp.float32)

    def vmem_bytes(tb_, ta_):
        dbuf = 2 * (tb_ * LD_pad * cbytes        # x (double-buffered)
                    + LD_pad * ta_ * cbytes      # W_enc tile
                    + ta_ * 4                    # b_enc tile
                    + ta_ * LD_pad * cbytes      # W_dec tile
                    + LD_pad * 4                 # b_dec
                    + tb_ * LD_pad * obytes)     # out
        acc = tb_ * LD_pad * 4 if use_acc else 0
        temps = tb_ * ta_ * (4 + cbytes) + 2 * tb_ * LD_pad * 4
        return dbuf + acc + temps

    # Shrink tiles until they fit the per-generation VMEM budget.
    # TODO(synk): for very large L*D on 64 MiB-VMEM parts (v7x), add an inner
    # LD-tiling pipeline instead of only shrinking ta/tb.
    while vmem_bytes(tb, ta) > budget:
        if ta > 256:
            ta = max(256, ta // 2)
        elif tb > 2 * sub:
            tb = _round_up(max(sub, tb // 2), sub)
        elif ta > 128:
            ta = 128
        else:
            break

    A_pad = _round_up(A, ta)
    B_pad = _round_up(B, tb)
    # Split the A tile in two halves so decode(half k) overlaps encode(half k+1).
    n_split = 2 if (ta >= 256 and ta % 256 == 0) else 1

    return CrosscoderPlan(B, L, D, A, tb, ta, B_pad, A_pad, LD_pad, n_split,
                          compute_dtype, out_dtype, int(vmem_limit))


def pack_crosscoder_params(w_enc, b_enc, w_dec, b_dec, plan):
    """One-time weight pack (reshape + cast + pad), hoisted out of the per-call path."""
    L, D, A = plan.L, plan.D, plan.A
    LD = L * D
    wenc2 = jnp.pad(w_enc.reshape(LD, A).astype(plan.compute_dtype),
                    ((0, plan.LD_pad - LD), (0, plan.A_pad - A)))
    wdec2 = jnp.pad(w_dec.reshape(A, LD).astype(plan.compute_dtype),
                    ((0, plan.A_pad - A), (0, plan.LD_pad - LD)))
    benc2 = jnp.pad(b_enc.reshape(1, A).astype(jnp.float32),
                    ((0, 0), (0, plan.A_pad - A)))
    bdec2 = jnp.pad(b_dec.reshape(1, LD).astype(jnp.float32),
                    ((0, 0), (0, plan.LD_pad - LD)))
    return wenc2, wdec2, benc2, bdec2


# --------------------------------------------------------------------------- #
# Kernels
# --------------------------------------------------------------------------- #
def _encode_decode(x_ref, wenc_ref, benc_ref, wdec_ref, n_split):
    """relu(x @ W_enc[:, tile] + b_enc[tile]) @ W_dec[tile, :], split over the A tile."""
    x = x_ref[...]
    ta = wenc_ref.shape[1]
    chunk = ta // n_split
    total = None
    for s in range(n_split):
        sl = slice(s * chunk, (s + 1) * chunk)
        enc = jnp.dot(x, wenc_ref[:, sl], preferred_element_type=jnp.float32)
        acts = jnp.maximum(enc + benc_ref[:, sl], 0.0).astype(wdec_ref.dtype)
        dec = jnp.dot(acts, wdec_ref[sl, :], preferred_element_type=jnp.float32)
        total = dec if total is None else total + dec
    return total


def _crosscoder_kernel_f32out(x_ref, wenc_ref, benc_ref, wdec_ref, bdec_ref, out_ref,
                              *, n_split):
    """f32 output: accumulate directly into the resident output block (no scratch)."""
    a = pl.program_id(1)

    @pl.when(a == 0)
    def _init():
        out_ref[...] = jnp.zeros_like(out_ref)

    out_ref[...] += _encode_decode(x_ref, wenc_ref, benc_ref, wdec_ref, n_split)

    @pl.when(a == pl.num_programs(1) - 1)
    def _finalize():
        out_ref[...] += bdec_ref[...]


def _crosscoder_kernel_acc(x_ref, wenc_ref, benc_ref, wdec_ref, bdec_ref, out_ref,
                           acc_ref, *, n_split):
    """Non-f32 output: f32 VMEM accumulator, cast on the final A step."""
    a = pl.program_id(1)

    @pl.when(a == 0)
    def _init():
        acc_ref[...] = jnp.zeros_like(acc_ref)

    acc_ref[...] += _encode_decode(x_ref, wenc_ref, benc_ref, wdec_ref, n_split)

    @pl.when(a == pl.num_programs(1) - 1)
    def _finalize():
        out_ref[...] = (acc_ref[...] + bdec_ref[...]).astype(out_ref.dtype)


# --------------------------------------------------------------------------- #
# Forward wrappers
# --------------------------------------------------------------------------- #
def crosscoder_forward_packed(x, packed, plan):
    """x: [B, L, D]; packed = pack_crosscoder_params(...)."""
    B, L, D = x.shape
    assert (B, L, D) == (plan.B, plan.L, plan.D), "shape mismatch with plan"
    wenc2, wdec2, benc2, bdec2 = packed
    LD = L * D

    x2 = jnp.pad(x.reshape(B, LD).astype(plan.compute_dtype),
                 ((0, plan.B_pad - B), (0, plan.LD_pad - LD)))

    grid = (plan.B_pad // plan.tb, plan.A_pad // plan.ta)
    n_btiles = grid[0]
    cbytes = plan.compute_dtype.itemsize
    obytes = plan.out_dtype.itemsize

    cost = pl.CostEstimate(
        flops=4 * plan.B_pad * plan.LD_pad * plan.A_pad,
        transcendentals=0,
        bytes_accessed=int(
            plan.B_pad * plan.LD_pad * cbytes                      # x
            + n_btiles * 2 * plan.LD_pad * plan.A_pad * cbytes     # weights per batch tile
            + n_btiles * 4 * (plan.A_pad + plan.LD_pad)            # biases
            + plan.B_pad * plan.LD_pad * obytes                    # output
        ),
    )

    in_specs = [
        pl.BlockSpec((plan.tb, plan.LD_pad), lambda b, a: (b, 0)),   # x tile
        pl.BlockSpec((plan.LD_pad, plan.ta), lambda b, a: (0, a)),   # W_enc A-tile
        pl.BlockSpec((1, plan.ta), lambda b, a: (0, a)),             # b_enc A-tile
        pl.BlockSpec((plan.ta, plan.LD_pad), lambda b, a: (a, 0)),   # W_dec A-tile
        pl.BlockSpec((1, plan.LD_pad), lambda b, a: (0, 0)),         # b_dec
    ]
    out_spec = pl.BlockSpec((plan.tb, plan.LD_pad), lambda b, a: (b, 0))

    if plan.out_dtype == jnp.dtype(jnp.float32):
        kernel = functools.partial(_crosscoder_kernel_f32out, n_split=plan.n_split)
        scratch = []
    else:
        kernel = functools.partial(_crosscoder_kernel_acc, n_split=plan.n_split)
        scratch = [pltpu.VMEM((plan.tb, plan.LD_pad), jnp.float32)]

    out2 = pl.pallas_call(
        kernel,
        out_shape=jax.ShapeDtypeStruct((plan.B_pad, plan.LD_pad), plan.out_dtype),
        grid_spec=pltpu.PrefetchScalarGridSpec(
            num_scalar_prefetch=0,
            grid=grid,
            in_specs=in_specs,
            out_specs=out_spec,
            scratch_shapes=scratch,
        ),
        compiler_params=pltpu.CompilerParams(
            dimension_semantics=("parallel", "arbitrary"),
            vmem_limit_bytes=int(plan.vmem_limit),
        ),
        cost_estimate=cost,
    )(x2, wenc2, benc2, wdec2, bdec2)

    return out2[:B, :LD].reshape(B, L, D)


def crosscoder_forward(x, w_enc, b_enc, w_dec, b_dec, *,
                       compute_dtype=jnp.bfloat16, tb=256, ta=512):
    """Convenience wrapper: plan + pack + run (prefer packing once for repeated calls)."""
    B, L, D = x.shape
    A = w_enc.shape[-1]
    plan = make_plan(B, L, D, A, compute_dtype=compute_dtype, out_dtype=x.dtype,
                     tb=tb, ta=ta)
    packed = pack_crosscoder_params(w_enc, b_enc, w_dec, b_dec, plan)
    return crosscoder_forward_packed(x, packed, plan)


# --------------------------------------------------------------------------- #
# Parameter init + references
# --------------------------------------------------------------------------- #
def init_params(key, n_layers, d_model, ae_dim, dec_init_norm=0.005, dtype=jnp.float32):
    """Deterministic re-implementation of the module __init__ (synthetic, no checkpoint)."""
    w_dec = jax.random.uniform(
        key, (ae_dim, n_layers, d_model), dtype=jnp.float32, minval=-1.0, maxval=1.0
    )
    norms = jnp.linalg.norm(w_dec, axis=-1, keepdims=True)
    w_dec = w_dec / norms * dec_init_norm
    w_enc = jnp.transpose(w_dec, (1, 2, 0))          # 'ae L D -> L D ae'
    b_enc = jnp.zeros((ae_dim,), dtype=dtype)
    b_dec = jnp.zeros((n_layers, d_model), dtype=dtype)
    return w_enc.astype(dtype), b_enc, w_dec.astype(dtype), b_dec


def reference_forward(x, w_enc, b_enc, w_dec, b_dec):
    x_enc = jnp.einsum("bld,lda->ba", x, w_enc)
    acts = jnp.maximum(x_enc + b_enc, 0.0)
    recon = jnp.einsum("ba,ald->bld", acts, w_dec)
    return recon + b_dec


def reference_forward_emulated(x, w_enc, b_enc, w_dec, b_dec, compute_dtype):
    """Reference that applies the same low-precision casts as the kernel."""
    f32 = functools.partial(jnp.asarray, dtype=jnp.float32)
    xc = f32(x.astype(compute_dtype))
    wec = f32(w_enc.astype(compute_dtype))
    wdc = f32(w_dec.astype(compute_dtype))
    x_enc = jnp.einsum("bld,lda->ba", xc, wec)
    acts = jnp.maximum(x_enc + b_enc.astype(jnp.float32), 0.0)
    acts = f32(acts.astype(compute_dtype))
    recon = jnp.einsum("ba,ald->bld", acts, wdc)
    return recon + b_dec.astype(jnp.float32)


if __name__ == "__main__":
    # Small, forward-consistent shapes (d_model deliberately not 128-aligned,
    # ae_dim spans multiple A tiles in the f32 run to exercise the accumulator).
    B, L, D, A = 96, 3, 40, 256
    key = jax.random.PRNGKey(0)
    k_x, k_p, k_be, k_bd = jax.random.split(key, 4)

    x = jax.random.normal(k_x, (B, L, D), dtype=jnp.float32)
    w_enc, b_enc, w_dec, b_dec = init_params(k_p, L, D, A)
    # Module inits biases to zero; use small nonzero biases so the
    # pl.when-guarded bias handling is actually exercised.
    b_enc = 0.01 * jax.random.normal(k_be, (A,), dtype=jnp.float32)
    b_dec = 0.01 * jax.random.normal(k_bd, (L, D), dtype=jnp.float32)

    ref = reference_forward(x, w_enc, b_enc, w_dec, b_dec)

    # 1) f32 path, small tiles: batch padding (96->128) and a 2-step A
    #    reduction with direct accumulation into the f32 output block.
    out_f32 = crosscoder_forward(
        x, w_enc, b_enc, w_dec, b_dec, compute_dtype=jnp.float32, tb=64, ta=128
    )
    out_f32 = jax.block_until_ready(out_f32)
    assert out_f32.shape == (B, L, D)
    assert jnp.allclose(out_f32, ref, atol=1e-5, rtol=1e-5), "f32 kernel mismatch vs reference"

    # 2) bf16 weight-streaming (production config): weights packed once and
    #    reused, f32 output accumulation, split-A encode/decode overlap.
    plan = make_plan(B, L, D, A, compute_dtype=jnp.bfloat16, out_dtype=jnp.float32)
    packed = pack_crosscoder_params(w_enc, b_enc, w_dec, b_dec, plan)
    out_bf16 = jax.block_until_ready(crosscoder_forward_packed(x, packed, plan))
    ref_bf16 = reference_forward_emulated(x, w_enc, b_enc, w_dec, b_dec, jnp.bfloat16)
    assert jnp.allclose(out_bf16, ref_bf16, atol=1e-5, rtol=1e-2), (
        "bf16 kernel mismatch vs emulated reference"
    )

    # 3) bf16 activations + bf16 output: exercises the f32 VMEM accumulator path.
    x_b = x.astype(jnp.bfloat16)
    out_b = crosscoder_forward(x_b, w_enc, b_enc, w_dec, b_dec, compute_dtype=jnp.bfloat16)
    out_b = jax.block_until_ready(out_b)
    ref_b = reference_forward_emulated(
        x_b, w_enc, b_enc, w_dec, b_dec, jnp.bfloat16
    ).astype(jnp.bfloat16)
    assert jnp.allclose(out_b.astype(jnp.float32), ref_b.astype(jnp.float32),
                        atol=2e-3, rtol=5e-2), "bf16-output kernel mismatch"

    print("KERNEL_OK")
</pallas_src>

<mosaic_0001>
module attributes {stable_mosaic.version = 11 : i64} {
  func.func @_crosscoder_kernel_f32out(%arg0: i32, %arg1: i32, %arg2: memref<64x128xf32, #tpu.memory_space<vmem>>, %arg3: memref<128x128xf32, #tpu.memory_space<vmem>>, %arg4: memref<1x128xf32, #tpu.memory_space<vmem>>, %arg5: memref<128x128xf32, #tpu.memory_space<vmem>>, %arg6: memref<1x128xf32, #tpu.memory_space<vmem>>, %arg7: memref<64x128xf32, #tpu.memory_space<vmem>>) attributes {dimension_semantics = [#tpu.dimension_semantics<parallel>, #tpu.dimension_semantics<arbitrary>], iteration_bounds = array<i64: 2, 2>, scalar_prefetch = 0 : i64, scratch_operands = 0 : i64, tpu.core_type = #tpu.core_type<tc>, window_params = [{transform_indices = @transform_0, window_bounds = array<i64: 64, 128>}, {transform_indices = @transform_1, window_bounds = array<i64: 128, 128>}, {transform_indices = @transform_2, window_bounds = array<i64: 1, 128>}, {transform_indices = @transform_3, window_bounds = array<i64: 128, 128>}, {pipeline_mode = #tpu.pipeline_mode<synchronous>, transform_indices = @transform_4, window_bounds = array<i64: 1, 128>}, {transform_indices = @transform_5, window_bounds = array<i64: 64, 128>}]} {
    %c0_i32 = arith.constant 0 : i32
    %0 = arith.cmpi eq, %arg1, %c0_i32 : i32
    %1 = arith.extui %0 : i1 to i32
    %c0_i32_0 = arith.constant 0 : i32
    %2 = arith.cmpi ne, %1, %c0_i32_0 : i32
    scf.if %2 {
      %cst_15 = arith.constant 0.000000e+00 : f32
      %19 = vector.broadcast %cst_15 : f32 to vector<64x128xf32>
      %c0_16 = arith.constant 0 : index
      %c0_17 = arith.constant 0 : index
      %20 = vector.load %arg7[%c0_16, %c0_17] : memref<64x128xf32, #tpu.memory_space<vmem>>, vector<64x128xf32>
      tpu.vector_store %arg7[%c0_16, %c0_17], %19 {strides = array<i32>} : memref<64x128xf32, #tpu.memory_space<vmem>>, vector<64x128xf32>,
    } else {
    }
    %c0 = arith.constant 0 : index
    %c0_1 = arith.constant 0 : index
    %3 = vector.load %arg7[%c0, %c0_1] : memref<64x128xf32, #tpu.memory_space<vmem>>, vector<64x128xf32>
    %c0_2 = arith.constant 0 : index
    %c0_3 = arith.constant 0 : index
    %4 = vector.load %arg2[%c0_2, %c0_3] : memref<64x128xf32, #tpu.memory_space<vmem>>, vector<64x128xf32>
    %c0_4 = arith.constant 0 : index
    %c0_5 = arith.constant 0 : index
    %5 = vector.load %arg3[%c0_4, %c0_5] : memref<128x128xf32, #tpu.memory_space<vmem>>, vector<128x128xf32>
    %cst = arith.constant dense<0.000000e+00> : vector<64x128xf32>
    %6 = tpu.matmul %4, %5, %cst {dimension_numbers = #tpu.dot_dimension_numbers<[1], [0], [0], [1], [0, 0, 1, 1], [], []>} : vector<64x128xf32>, vector<128x128xf32>, vector<64x128xf32> -> vector<64x128xf32>
    %c0_6 = arith.constant 0 : index
    %c0_7 = arith.constant 0 : index
    %7 = vector.load %arg4[%c0_6, %c0_7] : memref<1x128xf32, #tpu.memory_space<vmem>>, vector<1x128xf32>
    %8 = vector.broadcast %7 : vector<1x128xf32> to vector<64x128xf32>
    %9 = arith.addf %6, %8 : vector<64x128xf32>
    %cst_8 = arith.constant 0.000000e+00 : f32
    %10 = vector.broadcast %cst_8 : f32 to vector<64x128xf32>
    %11 = arith.maximumf %9, %10 : vector<64x128xf32>
    %c0_9 = arith.constant 0 : index
    %c0_10 = arith.constant 0 : index
    %12 = vector.load %arg5[%c0_9, %c0_10] : memref<128x128xf32, #tpu.memory_space<vmem>>, vector<128x128xf32>
    %cst_11 = arith.constant dense<0.000000e+00> : vector<64x128xf32>
    %13 = tpu.matmul %11, %12, %cst_11 {dimension_numbers = #tpu.dot_dimension_numbers<[1], [0], [0], [1], [0, 0, 1, 1], [], []>} : vector<64x128xf32>, vector<128x128xf32>, vector<64x128xf32> -> vector<64x128xf32>
    %14 = arith.addf %3, %13 : vector<64x128xf32>
    %c0_12 = arith.constant 0 : index
    %c0_13 = arith.constant 0 : index
    %15 = vector.load %arg7[%c0_12, %c0_13] : memref<64x128xf32, #tpu.memory_space<vmem>>, vector<64x128xf32>
    tpu.vector_store %arg7[%c0_12, %c0_13], %14 {strides = array<i32>} : memref<64x128xf32, #tpu.memory_space<vmem>>, vector<64x128xf32>,
    %c1_i32 = arith.constant 1 : i32
    %16 = arith.cmpi eq, %arg1, %c1_i32 : i32
    %17 = arith.extui %16 : i1 to i32
    %c0_i32_14 = arith.constant 0 : i32
    %18 = arith.cmpi ne, %17, %c0_i32_14 : i32
    scf.if %18 {
      %c0_15 = arith.constant 0 : index
      %c0_16 = arith.constant 0 : index
      %19 = vector.load %arg7[%c0_15, %c0_16] : memref<64x128xf32, #tpu.memory_space<vmem>>, vector<64x128xf32>
      %c0_17 = arith.constant 0 : index
      %c0_18 = arith.constant 0 : index
      %20 = vector.load %arg6[%c0_17, %c0_18] : memref<1x128xf32, #tpu.memory_space<vmem>>, vector<1x128xf32>
      %21 = vector.broadcast %20 : vector<1x128xf32> to vector<64x128xf32>
      %22 = arith.addf %19, %21 : vector<64x128xf32>
      %c0_19 = arith.constant 0 : index
      %c0_20 = arith.constant 0 : index
      %23 = vector.load %arg7[%c0_19, %c0_20] : memref<64x128xf32, #tpu.memory_space<vmem>>, vector<64x128xf32>
      tpu.vector_store %arg7[%c0_19, %c0_20], %22 {strides = array<i32>} : memref<64x128xf32, #tpu.memory_space<vmem>>, vector<64x128xf32>,
    } else {
    }
    return
  }
  func.func @transform_0(%arg0: i32, %arg1: i32) -> (i32, i32) {
    %c0_i32 = arith.constant 0 : i32
    %c0_i32_0 = arith.constant 0 : i32
    return %arg0, %c0_i32 : i32, i32
  }
  func.func @transform_1(%arg0: i32, %arg1: i32) -> (i32, i32) {
    %c0_i32 = arith.constant 0 : i32
    %c0_i32_0 = arith.constant 0 : i32
    return %c0_i32, %arg1 : i32, i32
  }
  func.func @transform_2(%arg0: i32, %arg1: i32) -> (i32, i32) {
    %c0_i32 = arith.constant 0 : i32
    %c0_i32_0 = arith.constant 0 : i32
    return %c0_i32, %arg1 : i32, i32
  }
  func.func @transform_3(%arg0: i32, %arg1: i32) -> (i32, i32) {
    %c0_i32 = arith.constant 0 : i32
    %c0_i32_0 = arith.constant 0 : i32
    return %arg1, %c0_i32 : i32, i32
  }
  func.func @transform_4(%arg0: i32, %arg1: i32) -> (i32, i32) {
    %c0_i32 = arith.constant 0 : i32
    %c0_i32_0 = arith.constant 0 : i32
    %c0_i32_1 = arith.constant 0 : i32
    return %c0_i32, %c0_i32_0 : i32, i32
  }
  func.func @transform_5(%arg0: i32, %arg1: i32) -> (i32, i32) {
    %c0_i32 = arith.constant 0 : i32
    %c0_i32_0 = arith.constant 0 : i32
    return %arg0, %c0_i32 : i32, i32
  }
}

</mosaic_0001>

<llo_original>
// kernel: tpu_custom_call.1
$region0: #{tpu_custom_call.1}
  #allocation0 [shape = 'u32[]', space=smem, size = 0x4, offset = 0x4, fixed_abs, tag = 'smem constant byte address 0x4 - core index']
  #allocation1 [shape = 'u32[72,128]{1,0:T(1,128)}', space=vmem, size = 0x9000, scoped, tag = 'internal scratch']
  %s0 = inlined_call_operand.hbm [shape: f32[128,128], index: 0, kind: input, shape index: {}]
  %s1 = inlined_call_operand.hbm [shape: f32[128,256], index: 1, kind: input, shape index: {}]
  %s2 = inlined_call_operand.hbm [shape: f32[1,256], index: 2, kind: input, shape index: {}]
  %s3 = inlined_call_operand.hbm [shape: f32[256,128], index: 3, kind: input, shape index: {}]
  %s4 = inlined_call_operand.vmem [shape: f32[1,128], index: 4, kind: input, shape index: {}]
  %s5 = inlined_call_operand.hbm [shape: f32[128,128], index: 5, kind: output, shape index: {}]
  %s6 = sld [smem:[#allocation0]]
  $region77: #{tpu_custom_call.1} parent=0
    _
  %s8 = ssub.s32 1, %s6
  %s9 = scalar_select 0, %s8, %s6
  $region1: #{tpu_custom_call.1} parent=0
    #allocation2 [shape = 'u8[65536]{0}', space=vmem, size = 0x10000, scoped, tag = 'input window, operand 0']
    #allocation3 [shape = 's32[2]{0}', space=sflag, size = 0x8, scoped, tag = 'scoped memory for tpu_custom_call.1']
    #allocation4 [shape = 's32[2]{0}', space=sflag, size = 0x8, scoped, tag = 'scoped memory for tpu_custom_call.1']
    #allocation5 [shape = 'u8[131072]{0}', space=vmem, size = 0x20000, scoped, tag = 'input window, operand 1']
    #allocation6 [shape = 's32[2]{0}', space=sflag, size = 0x8, scoped, tag = 'scoped memory for tpu_custom_call.1']
    #allocation7 [shape = 'u8[1024]{0}', space=vmem, size = 0x400, scoped, tag = 'input window, operand 2']
    #allocation8 [shape = 'u8[131072]{0}', space=vmem, size = 0x20000, scoped, tag = 'input window, operand 3']
    #allocation9 [shape = 's32[2]{0}', space=sflag, size = 0x8, scoped, tag = 'scoped memory for tpu_custom_call.1']
    #allocation10 [shape = 'u8[65536]{0}', space=vmem, size = 0x10000, scoped, tag = 'output window, operand 0']
    %10 = vsyncpa [#allocation3], 0
    %s11 = scalar_lea.sflag [#allocation3], 1
    %12 = vsyncpa %s11, 0
    %13 = vsyncpa [#allocation6], 0
    %s14 = scalar_lea.sflag [#allocation6], 1
    %15 = vsyncpa %s14, 0
    %16 = vsyncpa [#allocation9], 0
    %s17 = scalar_lea.sflag [#allocation9], 1
    %18 = vsyncpa %s17, 0
    %19 = vsyncpa [#allocation4], 0
    %s20 = scalar_lea.sflag [#allocation4], 1
    %21 = vsyncpa %s20, 0
    loop: start=0, step=1, limit=6
    $region2: #{tpu_custom_call.1} parent=1 // loop_pre_header
      _
    $region3: #{tpu_custom_call.1} parent=1 // loop_header
      %s23 = sphi 0, %s27
      %p24 = scmp.ge.s32.totalorder %s23, 6
      %s30 = sphi 0, %s42
      %s31 = sphi 0, %s38
      %s32 = sphi 0, %s30
      %s33 = sphi 0, %s31
      %s34 = sphi 0, %s32
      %s35 = sphi 0, %s33
      %s45 = sphi 0, %s47
      %s48 = sphi 0, %s45
      %s49 = sphi 0, %s48
      %s65 = sphi 0, %s49
      %s71 = sphi 0, %s73
      %s74 = sphi 0, %s71
      %s75 = sphi 0, %s74
      %s91 = sphi 0, %s75
      %s97 = sphi 0, %s99
      %s100 = sphi 0, %s97
      %s101 = sphi 0, %s100
      %s117 = sphi 0, %s101
      %s123 = sphi 0, %s125
      %s126 = sphi 0, %s123
      %s127 = sphi 0, %s126
      %s143 = sphi 0, %s127
      %s147 = sphi 0, %s147
      %s149 = sphi 0, %s147
      %s150 = sphi 0, %s149
      %s164 = sphi 0, %s150
      %s170 = sphi 0, %s172
      %s173 = sphi 0, %s170
      %s174 = sphi 0, %s173
      %s190 = sphi 0, %s174
    $region4: #{tpu_custom_call.1} parent=1 // loop_header_branch
      %26 = sbr.rel (%p24) target = $region8
    $region5: #{tpu_custom_call.1} parent=1 // loop_body
      %s28 = ssub.s32 %s23, 1
      %s29 = ssub.s32 %s23, 2
      %s36 = sadd.s32 1, %s31
      %p37 = scmp.ge.s32.totalorder %s36, 2
      %s38 = scalar_select %p37, 0, %s36
      %s39 = sadd.s32 1, %s30
      %s40 = scalar_select %p37, %s39, %s30
      %p41 = scmp.ge.s32.totalorder %s40, 2
      %s42 = scalar_select %p41, 0, %s40
      %s43 = ssub.s32 %s30, %s42
      %p44 = scmp.eq.s32.totalorder %s43, 0
      %s46 = sadd.s32 %s45, 1
      %s47 = scalar_select %p44, %s45, %s46
      %p50 = pneg %p44
      %p51 = scmp.eq.s32.totalorder %s23, 3
      %p52 = por %p50, %p51
      %p53 = scmp.ne.s32.totalorder %s45, %s48
      %p54 = scmp.eq.s32.totalorder %s23, 0
      %p55 = por %p53, %p54
      %p56 = scmp.ne.s32.totalorder %s45, %s48
      %p57 = scmp.eq.s32.totalorder %s28, 3
      %p58 = por %p56, %p57
      %p59 = scmp.ne.s32.totalorder %s48, %s49
      %p60 = scmp.eq.s32.totalorder %s28, 0
      %p61 = por %p59, %p60
      %p62 = scmp.ne.s32.totalorder %s48, %s49
      %p63 = scmp.eq.s32.totalorder %s29, 3
      %p64 = por %p62, %p63
      %p66 = scmp.ne.s32.totalorder %s49, %s65
      %p67 = scmp.eq.s32.totalorder %s29, 0
      %p68 = por %p66, %p67
      %s69 = ssub.s32 %s31, %s38
      %p70 = scmp.eq.s32.totalorder %s69, 0
      %s72 = sadd.s32 %s71, 1
      %s73 = scalar_select %p70, %s71, %s72
      %p76 = pneg %p70
      %p77 = scmp.eq.s32.totalorder %s23, 3
      %p78 = por %p76, %p77
      %p79 = scmp.ne.s32.totalorder %s71, %s74
      %p80 = scmp.eq.s32.totalorder %s23, 0
      %p81 = por %p79, %p80
      %p82 = scmp.ne.s32.totalorder %s71, %s74
      %p83 = scmp.eq.s32.totalorder %s28, 3
      %p84 = por %p82, %p83
      %p85 = scmp.ne.s32.totalorder %s74, %s75
      %p86 = scmp.eq.s32.totalorder %s28, 0
      %p87 = por %p85, %p86
      %p88 = scmp.ne.s32.totalorder %s74, %s75
      %p89 = scmp.eq.s32.totalorder %s29, 3
      %p90 = por %p88, %p89
      %p92 = scmp.ne.s32.totalorder %s75, %s91
      %p93 = scmp.eq.s32.totalorder %s29, 0
      %p94 = por %p92, %p93
      %s95 = ssub.s32 %s31, %s38
      %p96 = scmp.eq.s32.totalorder %s95, 0
      %s98 = sadd.s32 %s97, 1
      %s99 = scalar_select %p96, %s97, %s98
      %p102 = pneg %p96
      %p103 = scmp.eq.s32.totalorder %s23, 3
      %p104 = por %p102, %p103
      %p105 = scmp.ne.s32.totalorder %s97, %s100
      %p106 = scmp.eq.s32.totalorder %s23, 0
      %p107 = por %p105, %p106
      %p108 = scmp.ne.s32.totalorder %s97, %s100
      %p109 = scmp.eq.s32.totalorder %s28, 3
      %p110 = por %p108, %p109
      %p111 = scmp.ne.s32.totalorder %s100, %s101
      %p112 = scmp.eq.s32.totalorder %s28, 0
      %p113 = por %p111, %p112
      %p114 = scmp.ne.s32.totalorder %s100, %s101
      %p115 = scmp.eq.s32.totalorder %s29, 3
      %p116 = por %p114, %p115
      %p118 = scmp.ne.s32.totalorder %s101, %s117
      %p119 = scmp.eq.s32.totalorder %s29, 0
      %p120 = por %p118, %p119
      %s121 = ssub.s32 %s31, %s38
      %p122 = scmp.eq.s32.totalorder %s121, 0
      %s124 = sadd.s32 %s123, 1
      %s125 = scalar_select %p122, %s123, %s124
      %p128 = pneg %p122
      %p129 = scmp.eq.s32.totalorder %s23, 3
      %p130 = por %p128, %p129
      %p131 = scmp.ne.s32.totalorder %s123, %s126
      %p132 = scmp.eq.s32.totalorder %s23, 0
      %p133 = por %p131, %p132
      %p134 = scmp.ne.s32.totalorder %s123, %s126
      %p135 = scmp.eq.s32.totalorder %s28, 3
      %p136 = por %p134, %p135
      %p137 = scmp.ne.s32.totalorder %s126, %s127
      %p138 = scmp.eq.s32.totalorder %s28, 0
      %p139 = por %p137, %p138
      %p140 = scmp.ne.s32.totalorder %s126, %s127
      %p141 = scmp.eq.s32.totalorder %s29, 3
      %p142 = por %p140, %p141
      %p144 = scmp.ne.s32.totalorder %s127, %s143
      %p145 = scmp.eq.s32.totalorder %s29, 0
      %p146 = por %p144, %p145
      %s148 = sadd.s32 %s147, 1
      %p151 = scmp.eq.s32.totalorder %s23, 3
      %p152 = scmp.ne.s32.totalorder %s147, %s149
      %p153 = scmp.eq.s32.totalorder %s23, 0
      %p154 = por %p152, %p153
      %p155 = scmp.ne.s32.totalorder %s147, %s149
      %p156 = scmp.eq.s32.totalorder %s28, 3
      %p157 = por %p155, %p156
      %p158 = scmp.ne.s32.totalorder %s149, %s150
      %p159 = scmp.eq.s32.totalorder %s28, 0
      %p160 = por %p158, %p159
      %p161 = scmp.ne.s32.totalorder %s149, %s150
      %p162 = scmp.eq.s32.totalorder %s29, 3
      %p163 = por %p161, %p162
      %p165 = scmp.ne.s32.totalorder %s150, %s164
      %p166 = scmp.eq.s32.totalorder %s29, 0
      %p167 = por %p165, %p166
      %s168 = ssub.s32 %s30, %s42
      %p169 = scmp.eq.s32.totalorder %s168, 0
      %s171 = sadd.s32 %s170, 1
      %s172 = scalar_select %p169, %s170, %s171
      %p175 = pneg %p169
      %p176 = scmp.eq.s32.totalorder %s23, 3
      %p177 = por %p175, %p176
      %p178 = scmp.ne.s32.totalorder %s170, %s173
      %p179 = scmp.eq.s32.totalorder %s23, 0
      %p180 = por %p178, %p179
      %p181 = scmp.ne.s32.totalorder %s170, %s173
      %p182 = scmp.eq.s32.totalorder %s28, 3
      %p183 = por %p181, %p182
      %p184 = scmp.ne.s32.totalorder %s173, %s174
      %p185 = scmp.eq.s32.totalorder %s28, 0
      %p186 = por %p184, %p185
      %p187 = scmp.ne.s32.totalorder %s173, %s174
      %p188 = scmp.eq.s32.totalorder %s29, 3
      %p189 = por %p187, %p188
      %p191 = scmp.ne.s32.totalorder %s174, %s190
      %p192 = scmp.eq.s32.totalorder %s29, 0
      %p193 = por %p191, %p192
      %p194 = scmp.le.s32.totalorder 1, %s23
      %p195 = scmp.lt.s32.totalorder %s23, 5
      %p196 = pnand %p194, %p195
      %p197 = pneg %p196
      // Predicated region
      $region9: #{tpu_custom_call.1} parent=5 // pred_check
        _
      $region10: #{tpu_custom_call.1} parent=5 // pred_check_branch
        %199 = sbr.rel (%p196) target = $region12
      $region11: #{tpu_custom_call.1} parent=5 // pred_region
        %s200 = ssub.s32 %s23, 1
        // Predicated region
        $region13: #{tpu_custom_call.1} parent=11 // pred_check
          %p201 = pneg %p160
        $region14: #{tpu_custom_call.1} parent=11 // pred_check_branch
          %203 = sbr.rel (%p201) target = $region16
        $region15: #{tpu_custom_call.1} parent=11 // pred_region
          _
        $region16: #{tpu_custom_call.1} parent=11 // pred_fallthru
          _
      $region12: #{tpu_custom_call.1} parent=5 // pred_fallthru
        _
      %p204 = scmp.lt.s32.totalorder %s23, 4
      // Predicated region
      $region17: #{tpu_custom_call.1} parent=5 // pred_check
        %p205 = pneg %p204
      $region18: #{tpu_custom_call.1} parent=5 // pred_check_branch
        %207 = sbr.rel (%p205) target = $region20
      $region19: #{tpu_custom_call.1} parent=5 // pred_region
        // Predicated region
        $region21: #{tpu_custom_call.1} parent=19 // pred_check
          %p208 = pneg %p55
        $region22: #{tpu_custom_call.1} parent=19 // pred_check_branch
          %210 = sbr.rel (%p208) target = $region24
        $region23: #{tpu_custom_call.1} parent=19 // pred_region
          %s211 = sand.u32 %s45, 1
          %s212 = scalar_lea.sflag [#allocation3], %s211
          %s213 = sand.u32 %s45, 1
          %s214 = smul.addr %s213, 64
          %s215 = scalar_lea.vmem [#allocation2], %s214
          %s216 = smul.u32 8, %s30
          %218 = vsyncadd %s212, 0
          %s219 = smul.addr %s216, 8
          %s220 = scalar_lea.hbm %s0, %s219
          %s221 = sshll.u32 %s220, 4
          %s222 = int_to_ptr.hbm [resolvable:$true] %s221
          %s223 = sshll.u32 %s215, 4
          %s224 = int_to_ptr.vmem [resolvable:$true] %s223
          %229 = dma.hbm_to_vmem [thread:$0]  %s222, 1024, %s224, %s212, 128, 128, 8
        $region24: #{tpu_custom_call.1} parent=19 // pred_fallthru
          _
        // Predicated region
        $region25: #{tpu_custom_call.1} parent=19 // pred_check
          %p230 = pneg %p81
        $region26: #{tpu_custom_call.1} parent=19 // pred_check_branch
          %232 = sbr.rel (%p230) target = $region28
        $region27: #{tpu_custom_call.1} parent=19 // pred_region
          %s233 = sand.u32 %s23, 1
          %s234 = scalar_lea.sflag [#allocation6], %s233
          %s235 = sand.u32 %s71, 1
          %s236 = smul.addr %s235, 128
          %s237 = scalar_lea.vmem [#allocation5], %s236
          %239 = vsyncadd %s234, 0
          %s240 = smul.addr %s31, 8
          %s241 = scalar_lea.hbm %s1, %s240
          %s242 = sshll.u32 %s241, 4
          %s243 = int_to_ptr.hbm [resolvable:$true] %s242
          %s244 = sshll.u32 %s237, 4
          %s245 = int_to_ptr.vmem [resolvable:$true] %s244
          %250 = dma.hbm_to_vmem [thread:$0]  %s243, 2048, %s245, %s234, 256, 128, 8
        $region28: #{tpu_custom_call.1} parent=19 // pred_fallthru
          _
        // Predicated region
        $region29: #{tpu_custom_call.1} parent=19 // pred_check
          %p251 = pneg %p107
        $region30: #{tpu_custom_call.1} parent=19 // pred_check_branch
          %253 = sbr.rel (%p251) target = $region32
        $region31: #{tpu_custom_call.1} parent=19 // pred_region
          %s254 = sand.u32 %s23, 1
          %s255 = scalar_lea.sflag [#allocation6], %s254
          %s256 = sand.u32 %s97, 1
          %s257 = scalar_lea.vmem [#allocation7], %s256
          %259 = vsyncadd %s255, 0
          %s260 = scalar_lea.hbm %s2, %s31
          %s262 = sshll.u32 %s260, 4
          %s263 = int_to_ptr.hbm [resolvable:$true] %s262
          %s264 = sshll.u32 %s257, 4
          %s265 = int_to_ptr.vmem [resolvable:$true] %s264
          %267 = dma.hbm_to_vmem [thread:$0]  %s263, 16, %s265, %s255
        $region32: #{tpu_custom_call.1} parent=19 // pred_fallthru
          _
        // Predicated region
        $region33: #{tpu_custom_call.1} parent=19 // pred_check
          %p268 = pneg %p133
        $region34: #{tpu_custom_call.1} parent=19 // pred_check_branch
          %270 = sbr.rel (%p268) target = $region36
        $region35: #{tpu_custom_call.1} parent=19 // pred_region
          %s271 = sand.u32 %s123, 1
          %s272 = scalar_lea.sflag [#allocation9], %s271
          %s273 = sand.u32 %s123, 1
          %s274 = smul.addr %s273, 128
          %s275 = scalar_lea.vmem [#allocation8], %s274
          %s276 = smul.u32 16, %s31
          %278 = vsyncadd %s272, 0
          %s279 = smul.addr %s276, 8
          %s280 = scalar_lea.hbm %s3, %s279
          %s281 = sshll.u32 %s280, 4
          %s282 = int_to_ptr.hbm [resolvable:$true] %s281
          %s283 = sshll.u32 %s275, 4
          %s284 = int_to_ptr.vmem [resolvable:$true] %s283
          %289 = dma.hbm_to_vmem [thread:$0]  %s282, 2048, %s284, %s272, 128, 128, 8
        $region36: #{tpu_custom_call.1} parent=19 // pred_fallthru
          _
      $region20: #{tpu_custom_call.1} parent=5 // pred_fallthru
        _
      %p290 = scmp.le.s32.totalorder 1, %s23
      %p291 = scmp.lt.s32.totalorder %s23, 5
      %p292 = pnand %p290, %p291
      %p293 = pneg %p292
      // Predicated region
      $region37: #{tpu_custom_call.1} parent=5 // pred_check
        _
      $region38: #{tpu_custom_call.1} parent=5 // pred_check_branch
        %295 = sbr.rel (%p292) target = $region40
      $region39: #{tpu_custom_call.1} parent=5 // pred_region
        %s296 = ssub.s32 %s23, 1
        %s297 = sand.u32 %s48, 1
        %s298 = scalar_lea.sflag [#allocation3], %s297
        %s299 = sand.u32 %s48, 1
        %s300 = smul.addr %s299, 64
        %s301 = scalar_lea.vmem [#allocation2], %s300
        // Predicated region
        $region41: #{tpu_custom_call.1} parent=39 // pred_check
          %p302 = pneg %p61
        $region42: #{tpu_custom_call.1} parent=39 // pred_check_branch
          %304 = sbr.rel (%p302) target = $region44
        $region43: #{tpu_custom_call.1} parent=39 // pred_region
          %306 = dma.done %s298, 1024
        $region44: #{tpu_custom_call.1} parent=39 // pred_fallthru
          _
        %s307 = sand.u32 %s28, 1
        %s308 = scalar_lea.sflag [#allocation6], %s307
        %s309 = sand.u32 %s74, 1
        %s310 = smul.addr %s309, 128
        %s311 = scalar_lea.vmem [#allocation5], %s310
        // Predicated region
        $region45: #{tpu_custom_call.1} parent=39 // pred_check
          %p312 = pneg %p87
        $region46: #{tpu_custom_call.1} parent=39 // pred_check_branch
          %314 = sbr.rel (%p312) target = $region48
        $region47: #{tpu_custom_call.1} parent=39 // pred_region
          %316 = dma.done %s308, 2048
        $region48: #{tpu_custom_call.1} parent=39 // pred_fallthru
          _
        %s317 = sand.u32 %s28, 1
        %s318 = scalar_lea.sflag [#allocation6], %s317
        %s319 = sand.u32 %s100, 1
        %s320 = scalar_lea.vmem [#allocation7], %s319
        // Predicated region
        $region49: #{tpu_custom_call.1} parent=39 // pred_check
          %p321 = pneg %p113
        $region50: #{tpu_custom_call.1} parent=39 // pred_check_branch
          %323 = sbr.rel (%p321) target = $region52
        $region51: #{tpu_custom_call.1} parent=39 // pred_region
          %325 = dma.done %s318, 16
        $region52: #{tpu_custom_call.1} parent=39 // pred_fallthru
          _
        %s326 = sand.u32 %s126, 1
        %s327 = scalar_lea.sflag [#allocation9], %s326
        %s328 = sand.u32 %s126, 1
        %s329 = smul.addr %s328, 128
        %s330 = scalar_lea.vmem [#allocation8], %s329
        // Predicated region
        $region53: #{tpu_custom_call.1} parent=39 // pred_check
          %p331 = pneg %p139
        $region54: #{tpu_custom_call.1} parent=39 // pred_check_branch
          %333 = sbr.rel (%p331) target = $region56
        $region55: #{tpu_custom_call.1} parent=39 // pred_region
          %335 = dma.done %s327, 2048
        $region56: #{tpu_custom_call.1} parent=39 // pred_fallthru
          _
        %s336 = sand.u32 %s48, 1
        %s337 = scalar_lea.sflag [#allocation3], %s336
        %s338 = sand.u32 %s48, 1
        %s339 = smul.addr %s338, 64
        %s340 = scalar_lea.vmem [#allocation2], %s339
        %p341 = pneg %p61
        %p342 = pneg %p58
        %s343 = sand.u32 %s28, 1
        %s344 = scalar_lea.sflag [#allocation6], %s343
        %s345 = sand.u32 %s74, 1
        %s346 = smul.addr %s345, 128
        %s347 = scalar_lea.vmem [#allocation5], %s346
        %p348 = pneg %p87
        %p349 = pneg %p84
        %s350 = sand.u32 %s28, 1
        %s351 = scalar_lea.sflag [#allocation6], %s350
        %s352 = sand.u32 %s100, 1
        %s353 = scalar_lea.vmem [#allocation7], %s352
        %p354 = pneg %p113
        %p355 = pneg %p110
        %s356 = sand.u32 %s126, 1
        %s357 = scalar_lea.sflag [#allocation9], %s356
        %s358 = sand.u32 %s126, 1
        %s359 = smul.addr %s358, 128
        %s360 = scalar_lea.vmem [#allocation8], %s359
        %p361 = pneg %p139
        %p362 = pneg %p136
        %p363 = pneg %p160
        %p364 = pneg %p157
        %p365 = pneg %p186
        %p366 = pneg %p183
        %s367 = sand.u32 %s173, 1
        %s368 = scalar_lea.sflag [#allocation4], %s367
        %s369 = sand.u32 %s173, 1
        %s370 = smul.addr %s369, 64
        %s371 = scalar_lea.vmem [#allocation10], %s370
        %s372 = smul.u32 8, %s32
        %s373 = smul.u32 16, %s33
        %s374 = smul.u32 8, %s32
        %p375 = scmp.eq.s32.totalorder %s33, 0
        // Predicated region
        $region57: #{tpu_custom_call.1} parent=39 // pred_check
          %p376 = pneg %p375
        $region58: #{tpu_custom_call.1} parent=39 // pred_check_branch
          %378 = sbr.rel (%p376) target = $region60
        $region59: #{tpu_custom_call.1} parent=39 // pred_region
          %379 = vst [vmem:[%s371] sm:$0xff] 0.0
          %380 = vst [vmem:[%s371 + $0x8] sm:$0xff] 0.0
          %381 = vst [vmem:[%s371 + $0x10] sm:$0xff] 0.0
          %382 = vst [vmem:[%s371 + $0x18] sm:$0xff] 0.0
          %383 = vst [vmem:[%s371 + $0x20] sm:$0xff] 0.0
          %384 = vst [vmem:[%s371 + $0x28] sm:$0xff] 0.0
          %385 = vst [vmem:[%s371 + $0x30] sm:$0xff] 0.0
          %386 = vst [vmem:[%s371 + $0x38] sm:$0xff] 0.0
        $region60: #{tpu_custom_call.1} parent=39 // pred_fallthru
          _
        %v387 = vld [vmem:[%s371] sm:$0xff]
        %v388 = vld [vmem:[%s371 + $0x8] sm:$0xff]
        %v389 = vld [vmem:[%s371 + $0x10] sm:$0xff]
        %v390 = vld [vmem:[%s371 + $0x18] sm:$0xff]
        %v391 = vld [vmem:[%s371 + $0x20] sm:$0xff]
        %v392 = vld [vmem:[%s371 + $0x28] sm:$0xff]
        %v393 = vld [vmem:[%s371 + $0x30] sm:$0xff]
        %v394 = vld [vmem:[%s371 + $0x38] sm:$0xff]
        %v395 = vld [vmem:[%s301] sm:$0xff]
        %v396 = vld [vmem:[%s301 + $0x8] sm:$0xff]
        %v397 = vld [vmem:[%s301 + $0x10] sm:$0xff]
        %v398 = vld [vmem:[%s301 + $0x18] sm:$0xff]
        %v399 = vld [vmem:[%s301 + $0x20] sm:$0xff]
        %v400 = vld [vmem:[%s301 + $0x28] sm:$0xff]
        %v401 = vld [vmem:[%s301 + $0x30] sm:$0xff]
        %v402 = vld [vmem:[%s301 + $0x38] sm:$0xff]
        %v403 = vld [vmem:[%s311] sm:$0xff]
        %v404 = vld [vmem:[%s311 + $0x8] sm:$0xff]
        %v405 = vld [vmem:[%s311 + $0x10] sm:$0xff]
        %v406 = vld [vmem:[%s311 + $0x18] sm:$0xff]
        %v407 = vld [vmem:[%s311 + $0x20] sm:$0xff]
        %v408 = vld [vmem:[%s311 + $0x28] sm:$0xff]
        %v409 = vld [vmem:[%s311 + $0x30] sm:$0xff]
        %v410 = vld [vmem:[%s311 + $0x38] sm:$0xff]
        %v411 = vld [vmem:[%s311 + $0x40] sm:$0xff]
        %v412 = vld [vmem:[%s311 + $0x48] sm:$0xff]
        %v413 = vld [vmem:[%s311 + $0x50] sm:$0xff]
        %v414 = vld [vmem:[%s311 + $0x58] sm:$0xff]
        %v415 = vld [vmem:[%s311 + $0x60] sm:$0xff]
        %v416 = vld [vmem:[%s311 + $0x68] sm:$0xff]
        %v417 = vld [vmem:[%s311 + $0x70] sm:$0xff]
        %v418 = vld [vmem:[%s311 + $0x78] sm:$0xff]
        %v419 = vld [vmem:[%s320] sm:$0x1]
        %v421 = vperm.slane %v419, 0
        %423 = vmatpush.msra.mxu0 %v418
        %424 = vmatpush.msra.mxu0 %v417
        %425 = vmatpush.msra.mxu0 %v416
        %426 = vmatpush.msra.mxu0 %v415
        %427 = vmatpush.msra.mxu0 %v414
        %428 = vmatpush.msra.mxu0 %v413
        %429 = vmatpush.msra.mxu0 %v412
        %430 = vmatpush.msra.mxu0 %v411
        %431 = vmatpush.msra.mxu0 %v410
        %432 = vmatpush.msra.mxu0 %v409
        %433 = vmatpush.msra.mxu0 %v408
        %434 = vmatpush.msra.mxu0 %v407
        %435 = vmatpush.msra.mxu0 %v406
        %436 = vmatpush.msra.mxu0 %v405
        %437 = vmatpush.msra.mxu0 %v404
        %438 = vmatpush.msra.mxu0 %v403
        %439 = vmatmul.f32.gmra.mxu0 %v395
        %v440 = vpop.f32.mrf.mxu0
        %v441 = vadd.f32 %v421, %v440
        %442 = vmatmul.f32.gmra.mxu0 %v396
        %v443 = vpop.f32.mrf.mxu0
        %v444 = vadd.f32 %v421, %v443
        %445 = vmatmul.f32.gmra.mxu0 %v397
        %v446 = vpop.f32.mrf.mxu0
        %v447 = vadd.f32 %v421, %v446
        %448 = vmatmul.f32.gmra.mxu0 %v398
        %v449 = vpop.f32.mrf.mxu0
        %v450 = vadd.f32 %v421, %v449
        %451 = vmatmul.f32.gmra.mxu0 %v399
        %v452 = vpop.f32.mrf.mxu0
        %v453 = vadd.f32 %v421, %v452
        %454 = vmatmul.f32.gmra.mxu0 %v400
        %v455 = vpop.f32.mrf.mxu0
        %v456 = vadd.f32 %v421, %v455
        %457 = vmatmul.f32.gmra.mxu0 %v401
        %v458 = vpop.f32.mrf.mxu0
        %v459 = vadd.f32 %v421, %v458
        %460 = vmatmul.f32.gmra.mxu0 %v402
        %v461 = vpop.f32.mrf.mxu0
        %v462 = vadd.f32 %v421, %v461
        %463 = vdwg.mxu0
        %v464 = vmax.f32 %v441, 0.0
        %v465 = vmax.f32 %v444, 0.0
        %v466 = vmax.f32 %v447, 0.0
        %v467 = vmax.f32 %v450, 0.0
        %v468 = vmax.f32 %v453, 0.0
        %v469 = vmax.f32 %v456, 0.0
        %v470 = vmax.f32 %v459, 0.0
        %v471 = vmax.f32 %v462, 0.0
        %v472 = vld [vmem:[%s330] sm:$0xff]
        %v473 = vld [vmem:[%s330 + $0x8] sm:$0xff]
        %v474 = vld [vmem:[%s330 + $0x10] sm:$0xff]
        %v475 = vld [vmem:[%s330 + $0x18] sm:$0xff]
        %v476 = vld [vmem:[%s330 + $0x20] sm:$0xff]
        %v477 = vld [vmem:[%s330 + $0x28] sm:$0xff]
        %v478 = vld [vmem:[%s330 + $0x30] sm:$0xff]
        %v479 = vld [vmem:[%s330 + $0x38] sm:$0xff]
        %v480 = vld [vmem:[%s330 + $0x40] sm:$0xff]
        %v481 = vld [vmem:[%s330 + $0x48] sm:$0xff]
        %v482 = vld [vmem:[%s330 + $0x50] sm:$0xff]
        %v483 = vld [vmem:[%s330 + $0x58] sm:$0xff]
        %v484 = vld [vmem:[%s330 + $0x60] sm:$0xff]
        %v485 = vld [vmem:[%s330 + $0x68] sm:$0xff]
        %v486 = vld [vmem:[%s330 + $0x70] sm:$0xff]
        %v487 = vld [vmem:[%s330 + $0x78] sm:$0xff]
        %488 = vmatpush.msra.mxu0 %v487
        %489 = vmatpush.msra.mxu0 %v486
        %490 = vmatpush.msra.mxu0 %v485
        %491 = vmatpush.msra.mxu0 %v484
        %492 = vmatpush.msra.mxu0 %v483
        %493 = vmatpush.msra.mxu0 %v482
        %494 = vmatpush.msra.mxu0 %v481
        %495 = vmatpush.msra.mxu0 %v480
        %496 = vmatpush.msra.mxu0 %v479
        %497 = vmatpush.msra.mxu0 %v478
        %498 = vmatpush.msra.mxu0 %v477
        %499 = vmatpush.msra.mxu0 %v476
        %500 = vmatpush.msra.mxu0 %v475
        %501 = vmatpush.msra.mxu0 %v474
        %502 = vmatpush.msra.mxu0 %v473
        %503 = vmatpush.msra.mxu0 %v472
        %504 = vmatmul.f32.gmra.mxu0 %v464
        %v505 = vpop.f32.mrf.mxu0
        %v506 = vadd.f32 0.0, %v505
        %507 = vmatmul.f32.gmra.mxu0 %v465
        %v508 = vpop.f32.mrf.mxu0
        %v509 = vadd.f32 0.0, %v508
        %510 = vmatmul.f32.gmra.mxu0 %v466
        %v511 = vpop.f32.mrf.mxu0
        %v512 = vadd.f32 0.0, %v511
        %513 = vmatmul.f32.gmra.mxu0 %v467
        %v514 = vpop.f32.mrf.mxu0
        %v515 = vadd.f32 0.0, %v514
        %516 = vmatmul.f32.gmra.mxu0 %v468
        %v517 = vpop.f32.mrf.mxu0
        %v518 = vadd.f32 0.0, %v517
        %519 = vmatmul.f32.gmra.mxu0 %v469
        %v520 = vpop.f32.mrf.mxu0
        %v521 = vadd.f32 0.0, %v520
        %522 = vmatmul.f32.gmra.mxu0 %v470
        %v523 = vpop.f32.mrf.mxu0
        %v524 = vadd.f32 0.0, %v523
        %525 = vmatmul.f32.gmra.mxu0 %v471
        %v526 = vpop.f32.mrf.mxu0
        %v527 = vadd.f32 0.0, %v526
        %528 = vdwg.mxu0
        %v529 = vadd.f32 %v387, %v506
        %v530 = vadd.f32 %v388, %v509
        %v531 = vadd.f32 %v389, %v512
        %v532 = vadd.f32 %v390, %v515
        %v533 = vadd.f32 %v391, %v518
        %v534 = vadd.f32 %v392, %v521
        %v535 = vadd.f32 %v393, %v524
        %v536 = vadd.f32 %v394, %v527
        %537 = vst [vmem:[%s371] sm:$0xff] %v529
        %538 = vst [vmem:[%s371 + $0x8] sm:$0xff] %v530
        %539 = vst [vmem:[%s371 + $0x10] sm:$0xff] %v531
        %540 = vst [vmem:[%s371 + $0x18] sm:$0xff] %v532
        %541 = vst [vmem:[%s371 + $0x20] sm:$0xff] %v533
        %542 = vst [vmem:[%s371 + $0x28] sm:$0xff] %v534
        %543 = vst [vmem:[%s371 + $0x30] sm:$0xff] %v535
        %544 = vst [vmem:[%s371 + $0x38] sm:$0xff] %v536
        %p545 = scmp.eq.s32.totalorder %s33, 1
        // Predicated region
        $region61: #{tpu_custom_call.1} parent=39 // pred_check
          %p546 = pneg %p545
        $region62: #{tpu_custom_call.1} parent=39 // pred_check_branch
          %548 = sbr.rel (%p546) target = $region64
        $region63: #{tpu_custom_call.1} parent=39 // pred_region
          %v549 = vld [vmem:[%s371] sm:$0xff]
          %v550 = vld [vmem:[%s371 + $0x8] sm:$0xff]
          %v551 = vld [vmem:[%s371 + $0x10] sm:$0xff]
          %v552 = vld [vmem:[%s371 + $0x18] sm:$0xff]
          %v553 = vld [vmem:[%s371 + $0x20] sm:$0xff]
          %v554 = vld [vmem:[%s371 + $0x28] sm:$0xff]
          %v555 = vld [vmem:[%s371 + $0x30] sm:$0xff]
          %v556 = vld [vmem:[%s371 + $0x38] sm:$0xff]
          %v557 = vld [vmem:[%s4] sm:$0x1]
          %v559 = vperm.slane %v557, 0
          %v561 = vadd.f32 %v549, %v559
          %v562 = vadd.f32 %v550, %v559
          %v563 = vadd.f32 %v551, %v559
          %v564 = vadd.f32 %v552, %v559
          %v565 = vadd.f32 %v553, %v559
          %v566 = vadd.f32 %v554, %v559
          %v567 = vadd.f32 %v555, %v559
          %v568 = vadd.f32 %v556, %v559
          %569 = vst [vmem:[%s371] sm:$0xff] %v561
          %570 = vst [vmem:[%s371 + $0x8] sm:$0xff] %v562
          %571 = vst [vmem:[%s371 + $0x10] sm:$0xff] %v563
          %572 = vst [vmem:[%s371 + $0x18] sm:$0xff] %v564
          %573 = vst [vmem:[%s371 + $0x20] sm:$0xff] %v565
          %574 = vst [vmem:[%s371 + $0x28] sm:$0xff] %v566
          %575 = vst [vmem:[%s371 + $0x30] sm:$0xff] %v567
          %576 = vst [vmem:[%s371 + $0x38] sm:$0xff] %v568
        $region64: #{tpu_custom_call.1} parent=39 // pred_fallthru
          _
        %s577 = sand.u32 %s173, 1
        %s578 = scalar_lea.sflag [#allocation4], %s577
        %s579 = sand.u32 %s173, 1
        %s580 = smul.addr %s579, 64
        %s581 = scalar_lea.vmem [#allocation10], %s580
        // Predicated region
        $region65: #{tpu_custom_call.1} parent=39 // pred_check
          %p582 = pneg %p183
        $region66: #{tpu_custom_call.1} parent=39 // pred_check_branch
          %584 = sbr.rel (%p582) target = $region68
        $region67: #{tpu_custom_call.1} parent=39 // pred_region
          %s585 = smul.u32 8, %s32
          %587 = vsyncadd %s578, 0
          %s588 = smul.addr %s585, 8
          %s589 = scalar_lea.hbm %s5, %s588
          %s590 = sshll.u32 %s581, 4
          %s591 = int_to_ptr.vmem [resolvable:$true] %s590
          %s592 = sshll.u32 %s589, 4
          %s593 = int_to_ptr.hbm [resolvable:$true] %s592
          %598 = dma.vmem_to_hbm [thread:$0]  %s591, 1024, %s593, %s578, 128, 128, 8
        $region68: #{tpu_custom_call.1} parent=39 // pred_fallthru
          _
      $region40: #{tpu_custom_call.1} parent=5 // pred_fallthru
        _
      %p599 = scmp.le.s32.totalorder 2, %s23
      // Predicated region
      $region69: #{tpu_custom_call.1} parent=5 // pred_check
        %p600 = pneg %p599
      $region70: #{tpu_custom_call.1} parent=5 // pred_check_branch
        %602 = sbr.rel (%p600) target = $region72
      $region71: #{tpu_custom_call.1} parent=5 // pred_region
        %s603 = ssub.s32 %s23, 2
        // Predicated region
        $region73: #{tpu_custom_call.1} parent=71 // pred_check
          %p604 = pneg %p189
        $region74: #{tpu_custom_call.1} parent=71 // pred_check_branch
          %606 = sbr.rel (%p604) target = $region76
        $region75: #{tpu_custom_call.1} parent=71 // pred_region
          %s607 = sand.u32 %s174, 1
          %s608 = scalar_lea.sflag [#allocation4], %s607
          %s609 = sand.u32 %s174, 1
          %s610 = smul.addr %s609, 64
          %s611 = scalar_lea.vmem [#allocation10], %s610
          %613 = dma.done %s608, 1024
        $region76: #{tpu_custom_call.1} parent=71 // pred_fallthru
          _
      $region72: #{tpu_custom_call.1} parent=5 // pred_fallthru
        _
    $region6: #{tpu_custom_call.1} parent=1 // loop_footer
      %s27 = sadd.s32 1, %s23
    $region7: #{tpu_custom_call.1} parent=1 // loop_footer_branch
      %22 = sbr.rel target = $region3
    $region8: #{tpu_custom_call.1} parent=1 // loop_exit
      _
    %614 = vsyncpa [#allocation3], 1
    %s615 = scalar_lea.sflag [#allocation3], 1
    %616 = vsyncpa %s615, 1
    %617 = vsyncpa [#allocation6], 1
    %s618 = scalar_lea.sflag [#allocation6], 1
    %619 = vsyncpa %s618, 1
    %620 = vsyncpa [#allocation9], 1
    %s621 = scalar_lea.sflag [#allocation9], 1
    %622 = vsyncpa %s621, 1
    %623 = vsyncpa [#allocation4], 1
    %s624 = scalar_lea.sflag [#allocation4], 1
    %625 = vsyncpa %s624, 1

</llo_original>
